<compile_context>
chip_gen: v7x
topology: tpu7x:2x2x1
jax: 0.10.0
libtpu: 0.0.40
codegen_flags: <defaults>
</compile_context>

<pallas_src>
import functools

import jax
import jax.numpy as jnp
from jax import lax
from jax.experimental import pallas as pl
from jax.experimental.pallas import tpu as pltpu


def _round_up(x, m):
    return ((x + m - 1) // m) * m


# ----------------------------------------------------------------------------
# Kernels
# ----------------------------------------------------------------------------
def _dw_conv_bn_relu_kernel(x_ref, w_ref, b_ref, o_ref, slab_ref, *, h, w):
    """Depthwise 3x3 (1 channel per group) + folded BN + ReLU — pure VPU, f32.

    x_ref    : (nb, ct, H*W)  f32  raw NCHW activations, spatial flattened.
    w_ref    : (9, ct, 1)     f32  BN-scale-folded per-channel tap weights.
    b_ref    : (ct, 1)        f32  folded BN bias.
    o_ref    : (nb, ct, H*W)       output block (lane-dense).
    slab_ref : (nb, ct, LPAD) f32  scratch: zero-padded flat image slab.
    """
    nb, ct, hw = x_ref.shape
    base = _round_up(w + 1, 128)          # aligned start of the image in slab

    # Build the padded slab in VMEM (no HBM im2col / pad round trip).
    slab_ref[...] = jnp.zeros_like(slab_ref)
    slab_ref[:, :, base:base + hw] = x_ref[...]

    # Column-wrap masks, broadcast ONCE (JAX does not CSE broadcast_in_dim).
    col = lax.broadcasted_iota(jnp.int32, (1, 1, hw), 2) % w
    not_left = jnp.broadcast_to(col != 0, (nb, ct, hw))
    not_right = jnp.broadcast_to(col != (w - 1), (nb, ct, hw))

    # 9 VPU multiply-accumulates with per-channel scalar weights; group taps by
    # kx so only two masked selects are needed at the end.
    acc_kx = [jnp.zeros((nb, ct, hw), jnp.float32) for _ in range(3)]
    for ky in range(3):
        for kx in range(3):
            off = base - (w + 1) + ky * w + kx            # static lane offset
            tap = slab_ref[:, :, off:off + hw]            # (nb, ct, hw)
            wt = w_ref[ky * 3 + kx][None, :, :]           # (1, ct, 1)
            acc_kx[kx] = acc_kx[kx] + tap * wt

    zero = jnp.zeros((), jnp.float32)
    acc = (acc_kx[1]
           + jnp.where(not_left, acc_kx[0], zero)
           + jnp.where(not_right, acc_kx[2], zero))
    acc = acc + b_ref[...][None, :, :]
    o_ref[...] = jnp.maximum(acc, zero).astype(o_ref.dtype)


def _gconv_bn_relu_mxu_kernel(x_ref, w_ref, b_ref, o_ref, slab_ref, xall_ref,
                              *, h, w):
    """Grouped 3x3 conv (>=2 channels/group) as a block-diagonal merged-K
    bf16 MXU matmul, + folded BN + ReLU.

    x_ref    : (nb, Cin, H*W)   f32   raw NCHW activations, spatial flattened.
    w_ref    : (Cout, 9*Cin)    bf16  BN-scale-folded block-diagonal weights.
    b_ref    : (Cout, 1)        f32   folded BN bias.
    o_ref    : (nb, Cout, H*W)        output block (lane-dense).
    slab_ref : (nb, Cin, LPAD)  bf16  scratch: zero-padded flat image slab.
    xall_ref : (9*Cin, H*W)     bf16  scratch: per-image 9-tap stack.
    """
    nb, cin, hw = x_ref.shape
    base = _round_up(w + 1, 128)

    slab_ref[...] = jnp.zeros_like(slab_ref)
    slab_ref[:, :, base:base + hw] = x_ref[...].astype(slab_ref.dtype)

    col = lax.broadcasted_iota(jnp.int32, (1, hw), 1) % w
    not_left = jnp.broadcast_to(col != 0, (cin, hw))
    not_right = jnp.broadcast_to(col != (w - 1), (cin, hw))
    zero = jnp.zeros((), slab_ref.dtype)

    for b in range(nb):                                   # static, small
        for ky in range(3):
            for kx in range(3):
                off = base - (w + 1) + ky * w + kx
                tap = slab_ref[b, :, off:off + hw]        # (cin, hw) bf16
                if kx == 0:
                    tap = jnp.where(not_left, tap, zero)
                elif kx == 2:
                    tap = jnp.where(not_right, tap, zero)
                t = ky * 3 + kx
                xall_ref[t * cin:(t + 1) * cin, :] = tap  # aligned sublane store

        acc = jnp.dot(w_ref[...], xall_ref[...],
                      preferred_element_type=jnp.float32)  # (cout, hw)
        o_ref[b] = jnp.maximum(acc + b_ref[...], 0.0).astype(o_ref.dtype)


# ----------------------------------------------------------------------------
# Wrapper
# ----------------------------------------------------------------------------
@functools.partial(
    jax.jit,
    static_argnames=("groups", "images_per_step", "channel_tile", "out_dtype"))
def gconv_bn_relu_pallas(x_nchw, w_grouped, bn_scale, bn_bias, *, groups,
                         images_per_step=4, channel_tile=None, out_dtype=None):
    """x_nchw: (N, Cin, H, W).  w_grouped: (Cout, Cin//groups, 3, 3).

    bn_scale = gamma / sqrt(var + eps), bn_bias = beta - mean * bn_scale
    (inference-mode BatchNorm folded).  Returns (N, Cout, H, W) in `out_dtype`
    (default: x's dtype, preserving the module's semantics).
    """
    n, cin, h, w = x_nchw.shape
    cout = w_grouped.shape[0]
    assert cin % groups == 0 and cout % groups == 0
    ig, og = cin // groups, cout // groups
    hw = h * w
    out_dtype = jnp.dtype(x_nchw.dtype) if out_dtype is None else jnp.dtype(out_dtype)

    # Images per grid step: amortize the ~0.35us/step pipeline overhead while
    # keeping >=2 grid steps whenever N >= 2 (both v7x TensorCores get work).
    nb = 1
    for cand in range(1, min(images_per_step, n) + 1):
        if n % cand == 0 and n // cand >= 2:
            nb = cand

    base = _round_up(w + 1, 128)                 # aligned image start in slab
    lpad = _round_up(base + hw + w + 1, 128)     # slab length (covers all taps)

    # Free (metadata-only) reshape; no pad / cast / im2col pass through HBM.
    x_flat = x_nchw.reshape(n, cin, hw)
    b_col = bn_bias.reshape(cout, 1).astype(jnp.float32)

    if ig == 1 and og == 1:
        # --- Depthwise path (the module's config when in_chan == out_chan ==
        # 32): per-channel taps on the VPU, f32 end-to-end, no MXU.
        ct = cout if channel_tile is None else channel_tile
        assert cout % ct == 0 and (ct % 8 == 0 or ct == cout)

        w_taps = (w_grouped.reshape(cout, 9)
                  * bn_scale[:, None]).astype(jnp.float32)
        w_taps = jnp.transpose(w_taps, (1, 0)).reshape(9, cout, 1)

        kernel = functools.partial(_dw_conv_bn_relu_kernel, h=h, w=w)
        out_flat = pl.pallas_call(
            kernel,
            out_shape=jax.ShapeDtypeStruct((n, cout, hw), out_dtype),
            grid_spec=pltpu.PrefetchScalarGridSpec(
                num_scalar_prefetch=0,
                grid=(n // nb, cout // ct),
                in_specs=[
                    pl.BlockSpec((nb, ct, hw), lambda i, j: (i, j, 0)),
                    pl.BlockSpec((9, ct, 1), lambda i, j: (0, j, 0)),
                    pl.BlockSpec((ct, 1), lambda i, j: (j, 0)),
                ],
                out_specs=pl.BlockSpec((nb, ct, hw), lambda i, j: (i, j, 0)),
                scratch_shapes=[pltpu.VMEM((nb, ct, lpad), jnp.float32)],
            ),
            compiler_params=pltpu.CompilerParams(
                dimension_semantics=("parallel", "parallel"),
                vmem_limit_bytes=32 * 1024 * 1024),
        )(x_flat, w_taps, b_col)
    else:
        # --- Grouped path (>=2 channels per group): block-diagonal dense
        # weight + one merged-K bf16 MXU matmul (bit-identical to groups math).
        # Acceptable for the tiny per-group channel counts this module uses.
        # TODO(synk): for og,ig >= ~16 switch to per-group (og x 9*ig) dots to
        # avoid the groups-fold FLOP / weight-byte blowup.
        w_blocks = w_grouped.reshape(groups, og, ig, 3, 3)
        w_dense = jnp.einsum("goikl,gh->gohikl", w_blocks,
                             jnp.eye(groups, dtype=w_grouped.dtype))
        w_dense = (w_dense.reshape(cout, cin, 3, 3)
                   * bn_scale[:, None, None, None])
        w_all = jnp.transpose(w_dense, (0, 2, 3, 1)).reshape(cout, 9 * cin)
        w_all = w_all.astype(jnp.bfloat16)

        kernel = functools.partial(_gconv_bn_relu_mxu_kernel, h=h, w=w)
        out_flat = pl.pallas_call(
            kernel,
            out_shape=jax.ShapeDtypeStruct((n, cout, hw), out_dtype),
            grid_spec=pltpu.PrefetchScalarGridSpec(
                num_scalar_prefetch=0,
                grid=(n // nb,),
                in_specs=[
                    pl.BlockSpec((nb, cin, hw), lambda i: (i, 0, 0)),
                    pl.BlockSpec((cout, 9 * cin), lambda i: (0, 0)),
                    pl.BlockSpec((cout, 1), lambda i: (0, 0)),
                ],
                out_specs=pl.BlockSpec((nb, cout, hw), lambda i: (i, 0, 0)),
                scratch_shapes=[
                    pltpu.VMEM((nb, cin, lpad), jnp.bfloat16),
                    pltpu.VMEM((9 * cin, hw), jnp.bfloat16),
                ],
            ),
            compiler_params=pltpu.CompilerParams(
                dimension_semantics=("parallel",),
                vmem_limit_bytes=32 * 1024 * 1024),
        )(x_flat, w_all, b_col)

    # Already channels-first and lane-dense: only a free reshape remains.
    return out_flat.reshape(n, cout, h, w)


# ----------------------------------------------------------------------------
# Reference + test harness
# ----------------------------------------------------------------------------
def gconv_bn_relu_ref(x_nchw, w_grouped, bn_scale, bn_bias, *, groups):
    """Plain-JAX reference (grouped conv via feature_group_count)."""
    w_hwio = jnp.transpose(w_grouped, (2, 3, 1, 0))   # (3,3,Cin//G,Cout)
    y = lax.conv_general_dilated(
        x_nchw, w_hwio, window_strides=(1, 1), padding=((1, 1), (1, 1)),
        dimension_numbers=("NCHW", "HWIO", "NCHW"),
        feature_group_count=groups)
    y = y * bn_scale[None, :, None, None] + bn_bias[None, :, None, None]
    return jnp.maximum(y, 0.0)


def _make_params(key, cin, cout, groups):
    """Deterministic synthetic params. kaiming_normal_(a=1) => std=1/sqrt(fan_in)."""
    k1, k2, k3, k4, k5 = jax.random.split(key, 5)
    eps = 1e-5
    ig = cin // groups
    std = (1.0 / (ig * 9)) ** 0.5
    w_grouped = jax.random.normal(k1, (cout, ig, 3, 3), jnp.float32) * std

    gamma = 1.0 + 0.1 * jax.random.normal(k2, (cout,), jnp.float32)
    beta = 0.1 * jax.random.normal(k3, (cout,), jnp.float32)
    mean = 0.1 * jax.random.normal(k4, (cout,), jnp.float32)
    var = 0.5 + 0.5 * jnp.abs(jax.random.normal(k5, (cout,), jnp.float32))
    scale = gamma / jnp.sqrt(var + eps)
    bias = beta - mean * scale
    return w_grouped, scale, bias


if __name__ == "__main__":
    key = jax.random.PRNGKey(0)
    kx1, kp1, kx2, kp2, kx3, kp3 = jax.random.split(key, 6)
    G, H, W = 32, 16, 16   # groups=32 requires channel counts divisible by 32

    # --- Test 1: minimal module config (cin=cout=32 => depthwise VPU path),
    # f32 output, 2-D parallel grid (batch x channel tiles).
    N1, C1 = 2, 32
    x1 = jax.random.normal(kx1, (N1, C1, H, W), jnp.float32)
    w1, s1, b1 = _make_params(kp1, C1, C1, G)
    out1 = jax.block_until_ready(
        gconv_bn_relu_pallas(x1, w1, s1, b1, groups=G, channel_tile=16))
    ref1 = gconv_bn_relu_ref(x1, w1, s1, b1, groups=G)
    assert out1.shape == (N1, C1, H, W)
    err1 = float(jnp.max(jnp.abs(out1 - ref1)))
    assert jnp.allclose(out1, ref1, atol=2e-3, rtol=2e-3), err1

    # --- Test 2: 2 channels per group (cin=cout=64 => grouped MXU path),
    # bf16 output (halves the dominant HBM write stream).
    N2, C2 = 2, 64
    x2 = jax.random.normal(kx2, (N2, C2, H, W), jnp.float32)
    w2, s2, b2 = _make_params(kp2, C2, C2, G)
    out2 = jax.block_until_ready(
        gconv_bn_relu_pallas(x2, w2, s2, b2, groups=G, out_dtype=jnp.bfloat16))
    ref2 = gconv_bn_relu_ref(x2, w2, s2, b2, groups=G)
    assert out2.shape == (N2, C2, H, W) and out2.dtype == jnp.bfloat16
    err2 = float(jnp.max(jnp.abs(out2.astype(jnp.float32) - ref2)))
    assert jnp.allclose(out2.astype(jnp.float32), ref2, atol=5e-2, rtol=5e-2), err2

    # --- Test 3: N=4 exercises multi-image-per-step blocking (nb=2, 2 steps).
    N3, C3 = 4, 32
    x3 = jax.random.normal(kx3, (N3, C3, H, W), jnp.float32)
    w3, s3, b3 = _make_params(kp3, C3, C3, G)
    out3 = jax.block_until_ready(
        gconv_bn_relu_pallas(x3, w3, s3, b3, groups=G))
    ref3 = gconv_bn_relu_ref(x3, w3, s3, b3, groups=G)
    assert out3.shape == (N3, C3, H, W)
    err3 = float(jnp.max(jnp.abs(out3 - ref3)))
    assert jnp.allclose(out3, ref3, atol=2e-3, rtol=2e-3), err3

    print("KERNEL_OK")
</pallas_src>

<mosaic_0001>
module attributes {stable_mosaic.version = 11 : i64} {
  func.func @_dw_conv_bn_relu_kernel(%arg0: i32, %arg1: i32, %arg2: memref<1x16x256xf32, #tpu.memory_space<vmem>>, %arg3: memref<9x16x1xf32, #tpu.memory_space<vmem>>, %arg4: memref<16x1xf32, #tpu.memory_space<vmem>>, %arg5: memref<1x16x256xf32, #tpu.memory_space<vmem>>, %arg6: memref<1x16x512xf32, #tpu.memory_space<vmem>>) attributes {dimension_semantics = [#tpu.dimension_semantics<parallel>, #tpu.dimension_semantics<parallel>], iteration_bounds = array<i64: 2, 2>, scalar_prefetch = 0 : i64, scratch_operands = 1 : i64, tpu.core_type = #tpu.core_type<tc>, window_params = [{transform_indices = @transform_0, window_bounds = array<i64: 1, 16, 256>}, {transform_indices = @transform_1, window_bounds = array<i64: 9, 16, 1>}, {transform_indices = @transform_2, window_bounds = array<i64: 16, 1>}, {transform_indices = @transform_3, window_bounds = array<i64: 1, 16, 256>}]} {
    %cst = arith.constant 0.000000e+00 : f32
    %0 = vector.broadcast %cst : f32 to vector<1x16x512xf32>
    %c0 = arith.constant 0 : index
    %c0_0 = arith.constant 0 : index
    %c0_1 = arith.constant 0 : index
    %1 = vector.load %arg6[%c0, %c0_0, %c0_1] : memref<1x16x512xf32, #tpu.memory_space<vmem>>, vector<1x16x512xf32>
    tpu.vector_store %arg6[%c0, %c0_0, %c0_1], %0 {strides = array<i32>} : memref<1x16x512xf32, #tpu.memory_space<vmem>>, vector<1x16x512xf32>,
    %c0_2 = arith.constant 0 : index
    %c0_3 = arith.constant 0 : index
    %c0_4 = arith.constant 0 : index
    %2 = vector.load %arg2[%c0_2, %c0_3, %c0_4] : memref<1x16x256xf32, #tpu.memory_space<vmem>>, vector<1x16x256xf32>
    %c0_5 = arith.constant 0 : index
    %c0_6 = arith.constant 0 : index
    %c128 = arith.constant 128 : index
    %3 = vector.load %arg6[%c0_5, %c0_6, %c128] : memref<1x16x512xf32, #tpu.memory_space<vmem>>, vector<1x16x256xf32>
    tpu.vector_store %arg6[%c0_5, %c0_6, %c128], %2 {strides = array<i32>} : memref<1x16x512xf32, #tpu.memory_space<vmem>>, vector<1x16x256xf32>,
    %4 = tpu.iota {dimensions = array<i32: 2>} : vector<1x1x256xi32>
    %c16_i32 = arith.constant 16 : i32
    %c0_i32 = arith.constant 0 : i32
    %5 = arith.cmpi eq, %c16_i32, %c0_i32 : i32
    %c1_i32 = arith.constant 1 : i32
    %6 = arith.select %5, %c1_i32, %c16_i32 : i32
    %7 = vector.broadcast %6 : i32 to vector<1x1x256xi32>
    %8 = arith.remsi %4, %7 : vector<1x1x256xi32>
    %c0_i32_7 = arith.constant 0 : i32
    %9 = vector.broadcast %c0_i32_7 : i32 to vector<1x1x256xi32>
    %10 = arith.cmpi ne, %8, %9 : vector<1x1x256xi32>
    %c0_i32_8 = arith.constant 0 : i32
    %11 = vector.broadcast %c0_i32_8 : i32 to vector<1x1x256xi32>
    %12 = arith.cmpi slt, %8, %11 : vector<1x1x256xi32>
    %c0_i32_9 = arith.constant 0 : i32
    %13 = arith.cmpi slt, %6, %c0_i32_9 : i32
    %14 = vector.broadcast %13 : i1 to vector<1x1x256xi1>
    %15 = vector.broadcast %14 : vector<1x1x256xi1> to vector<1x1x256xi1>
    %16 = arith.xori %12, %15 : vector<1x1x256xi1>
    %17 = arith.andi %16, %10 : vector<1x1x256xi1>
    %18 = vector.broadcast %6 : i32 to vector<1x1x256xi32>
    %19 = arith.addi %8, %18 : vector<1x1x256xi32>
    %20 = arith.select %17, %19, %8 : vector<1x1x256xi1>, vector<1x1x256xi32>
    %c0_i32_10 = arith.constant 0 : i32
    %21 = vector.broadcast %c0_i32_10 : i32 to vector<1x1x256xi32>
    %22 = arith.cmpi ne, %20, %21 : vector<1x1x256xi32>
    %23 = vector.shape_cast %22 : vector<1x1x256xi1> to vector<1x1x256xi1>
    %24 = vector.broadcast %23 : vector<1x1x256xi1> to vector<1x16x256xi1>
    %c15_i32 = arith.constant 15 : i32
    %25 = vector.broadcast %c15_i32 : i32 to vector<1x1x256xi32>
    %26 = arith.cmpi ne, %20, %25 : vector<1x1x256xi32>
    %27 = vector.shape_cast %26 : vector<1x1x256xi1> to vector<1x1x256xi1>
    %28 = vector.broadcast %27 : vector<1x1x256xi1> to vector<1x16x256xi1>
    %cst_11 = arith.constant 0.000000e+00 : f32
    %29 = vector.broadcast %cst_11 : f32 to vector<1x16x256xf32>
    %cst_12 = arith.constant 0.000000e+00 : f32
    %30 = vector.broadcast %cst_12 : f32 to vector<1x16x256xf32>
    %cst_13 = arith.constant 0.000000e+00 : f32
    %31 = vector.broadcast %cst_13 : f32 to vector<1x16x256xf32>
    %c0_14 = arith.constant 0 : index
    %c0_15 = arith.constant 0 : index
    %c111 = arith.constant 111 : index
    %32 = vector.load %arg6[%c0_14, %c0_15, %c111] : memref<1x16x512xf32, #tpu.memory_space<vmem>>, vector<1x16x256xf32>
    %c0_16 = arith.constant 0 : index
    %c0_17 = arith.constant 0 : index
    %c0_18 = arith.constant 0 : index
    %33 = vector.load %arg3[%c0_16, %c0_17, %c0_18] : memref<9x16x1xf32, #tpu.memory_space<vmem>>, vector<1x16x1xf32>
    %34 = vector.shape_cast %33 : vector<1x16x1xf32> to vector<16x1xf32>
    %35 = vector.shape_cast %34 : vector<16x1xf32> to vector<1x16x1xf32>
    %36 = vector.broadcast %35 : vector<1x16x1xf32> to vector<1x16x256xf32>
    %37 = arith.mulf %32, %36 : vector<1x16x256xf32>
    %38 = arith.addf %29, %37 : vector<1x16x256xf32>
    %c0_19 = arith.constant 0 : index
    %c0_20 = arith.constant 0 : index
    %c112 = arith.constant 112 : index
    %39 = vector.load %arg6[%c0_19, %c0_20, %c112] : memref<1x16x512xf32, #tpu.memory_space<vmem>>, vector<1x16x256xf32>
    %c1 = arith.constant 1 : index
    %c0_21 = arith.constant 0 : index
    %c0_22 = arith.constant 0 : index
    %40 = vector.load %arg3[%c1, %c0_21, %c0_22] : memref<9x16x1xf32, #tpu.memory_space<vmem>>, vector<1x16x1xf32>
    %41 = vector.shape_cast %40 : vector<1x16x1xf32> to vector<16x1xf32>
    %42 = vector.shape_cast %41 : vector<16x1xf32> to vector<1x16x1xf32>
    %43 = vector.broadcast %42 : vector<1x16x1xf32> to vector<1x16x256xf32>
    %44 = arith.mulf %39, %43 : vector<1x16x256xf32>
    %45 = arith.addf %30, %44 : vector<1x16x256xf32>
    %c0_23 = arith.constant 0 : index
    %c0_24 = arith.constant 0 : index
    %c113 = arith.constant 113 : index
    %46 = vector.load %arg6[%c0_23, %c0_24, %c113] : memref<1x16x512xf32, #tpu.memory_space<vmem>>, vector<1x16x256xf32>
    %c2 = arith.constant 2 : index
    %c0_25 = arith.constant 0 : index
    %c0_26 = arith.constant 0 : index
    %47 = vector.load %arg3[%c2, %c0_25, %c0_26] : memref<9x16x1xf32, #tpu.memory_space<vmem>>, vector<1x16x1xf32>
    %48 = vector.shape_cast %47 : vector<1x16x1xf32> to vector<16x1xf32>
    %49 = vector.shape_cast %48 : vector<16x1xf32> to vector<1x16x1xf32>
    %50 = vector.broadcast %49 : vector<1x16x1xf32> to vector<1x16x256xf32>
    %51 = arith.mulf %46, %50 : vector<1x16x256xf32>
    %52 = arith.addf %31, %51 : vector<1x16x256xf32>
    %c0_27 = arith.constant 0 : index
    %c0_28 = arith.constant 0 : index
    %c127 = arith.constant 127 : index
    %53 = vector.load %arg6[%c0_27, %c0_28, %c127] : memref<1x16x512xf32, #tpu.memory_space<vmem>>, vector<1x16x256xf32>
    %c3 = arith.constant 3 : index
    %c0_29 = arith.constant 0 : index
    %c0_30 = arith.constant 0 : index
    %54 = vector.load %arg3[%c3, %c0_29, %c0_30] : memref<9x16x1xf32, #tpu.memory_space<vmem>>, vector<1x16x1xf32>
    %55 = vector.shape_cast %54 : vector<1x16x1xf32> to vector<16x1xf32>
    %56 = vector.shape_cast %55 : vector<16x1xf32> to vector<1x16x1xf32>
    %57 = vector.broadcast %56 : vector<1x16x1xf32> to vector<1x16x256xf32>
    %58 = arith.mulf %53, %57 : vector<1x16x256xf32>
    %59 = arith.addf %38, %58 : vector<1x16x256xf32>
    %c0_31 = arith.constant 0 : index
    %c0_32 = arith.constant 0 : index
    %c128_33 = arith.constant 128 : index
    %60 = vector.load %arg6[%c0_31, %c0_32, %c128_33] : memref<1x16x512xf32, #tpu.memory_space<vmem>>, vector<1x16x256xf32>
    %c4 = arith.constant 4 : index
    %c0_34 = arith.constant 0 : index
    %c0_35 = arith.constant 0 : index
    %61 = vector.load %arg3[%c4, %c0_34, %c0_35] : memref<9x16x1xf32, #tpu.memory_space<vmem>>, vector<1x16x1xf32>
    %62 = vector.shape_cast %61 : vector<1x16x1xf32> to vector<16x1xf32>
    %63 = vector.shape_cast %62 : vector<16x1xf32> to vector<1x16x1xf32>
    %64 = vector.broadcast %63 : vector<1x16x1xf32> to vector<1x16x256xf32>
    %65 = arith.mulf %60, %64 : vector<1x16x256xf32>
    %66 = arith.addf %45, %65 : vector<1x16x256xf32>
    %c0_36 = arith.constant 0 : index
    %c0_37 = arith.constant 0 : index
    %c129 = arith.constant 129 : index
    %67 = vector.load %arg6[%c0_36, %c0_37, %c129] : memref<1x16x512xf32, #tpu.memory_space<vmem>>, vector<1x16x256xf32>
    %c5 = arith.constant 5 : index
    %c0_38 = arith.constant 0 : index
    %c0_39 = arith.constant 0 : index
    %68 = vector.load %arg3[%c5, %c0_38, %c0_39] : memref<9x16x1xf32, #tpu.memory_space<vmem>>, vector<1x16x1xf32>
    %69 = vector.shape_cast %68 : vector<1x16x1xf32> to vector<16x1xf32>
    %70 = vector.shape_cast %69 : vector<16x1xf32> to vector<1x16x1xf32>
    %71 = vector.broadcast %70 : vector<1x16x1xf32> to vector<1x16x256xf32>
    %72 = arith.mulf %67, %71 : vector<1x16x256xf32>
    %73 = arith.addf %52, %72 : vector<1x16x256xf32>
    %c0_40 = arith.constant 0 : index
    %c0_41 = arith.constant 0 : index
    %c143 = arith.constant 143 : index
    %74 = vector.load %arg6[%c0_40, %c0_41, %c143] : memref<1x16x512xf32, #tpu.memory_space<vmem>>, vector<1x16x256xf32>
    %c6 = arith.constant 6 : index
    %c0_42 = arith.constant 0 : index
    %c0_43 = arith.constant 0 : index
    %75 = vector.load %arg3[%c6, %c0_42, %c0_43] : memref<9x16x1xf32, #tpu.memory_space<vmem>>, vector<1x16x1xf32>
    %76 = vector.shape_cast %75 : vector<1x16x1xf32> to vector<16x1xf32>
    %77 = vector.shape_cast %76 : vector<16x1xf32> to vector<1x16x1xf32>
    %78 = vector.broadcast %77 : vector<1x16x1xf32> to vector<1x16x256xf32>
    %79 = arith.mulf %74, %78 : vector<1x16x256xf32>
    %80 = arith.addf %59, %79 : vector<1x16x256xf32>
    %c0_44 = arith.constant 0 : index
    %c0_45 = arith.constant 0 : index
    %c144 = arith.constant 144 : index
    %81 = vector.load %arg6[%c0_44, %c0_45, %c144] : memref<1x16x512xf32, #tpu.memory_space<vmem>>, vector<1x16x256xf32>
    %c7 = arith.constant 7 : index
    %c0_46 = arith.constant 0 : index
    %c0_47 = arith.constant 0 : index
    %82 = vector.load %arg3[%c7, %c0_46, %c0_47] : memref<9x16x1xf32, #tpu.memory_space<vmem>>, vector<1x16x1xf32>
    %83 = vector.shape_cast %82 : vector<1x16x1xf32> to vector<16x1xf32>
    %84 = vector.shape_cast %83 : vector<16x1xf32> to vector<1x16x1xf32>
    %85 = vector.broadcast %84 : vector<1x16x1xf32> to vector<1x16x256xf32>
    %86 = arith.mulf %81, %85 : vector<1x16x256xf32>
    %87 = arith.addf %66, %86 : vector<1x16x256xf32>
    %c0_48 = arith.constant 0 : index
    %c0_49 = arith.constant 0 : index
    %c145 = arith.constant 145 : index
    %88 = vector.load %arg6[%c0_48, %c0_49, %c145] : memref<1x16x512xf32, #tpu.memory_space<vmem>>, vector<1x16x256xf32>
    %c8 = arith.constant 8 : index
    %c0_50 = arith.constant 0 : index
    %c0_51 = arith.constant 0 : index
    %89 = vector.load %arg3[%c8, %c0_50, %c0_51] : memref<9x16x1xf32, #tpu.memory_space<vmem>>, vector<1x16x1xf32>
    %90 = vector.shape_cast %89 : vector<1x16x1xf32> to vector<16x1xf32>
    %91 = vector.shape_cast %90 : vector<16x1xf32> to vector<1x16x1xf32>
    %92 = vector.broadcast %91 : vector<1x16x1xf32> to vector<1x16x256xf32>
    %93 = arith.mulf %88, %92 : vector<1x16x256xf32>
    %94 = arith.addf %73, %93 : vector<1x16x256xf32>
    %cst_52 = arith.constant 0.000000e+00 : f32
    %95 = vector.broadcast %cst_52 : f32 to vector<1x16x256xf32>
    %96 = arith.select %24, %80, %95 : vector<1x16x256xi1>, vector<1x16x256xf32>
    %97 = arith.addf %87, %96 : vector<1x16x256xf32>
    %cst_53 = arith.constant 0.000000e+00 : f32
    %98 = vector.broadcast %cst_53 : f32 to vector<1x16x256xf32>
    %99 = arith.select %28, %94, %98 : vector<1x16x256xi1>, vector<1x16x256xf32>
    %100 = arith.addf %97, %99 : vector<1x16x256xf32>
    %c0_54 = arith.constant 0 : index
    %c0_55 = arith.constant 0 : index
    %101 = vector.load %arg4[%c0_54, %c0_55] : memref<16x1xf32, #tpu.memory_space<vmem>>, vector<16x1xf32>
    %102 = vector.shape_cast %101 : vector<16x1xf32> to vector<1x16x1xf32>
    %103 = vector.broadcast %102 : vector<1x16x1xf32> to vector<1x16x256xf32>
    %104 = arith.addf %100, %103 : vector<1x16x256xf32>
    %cst_56 = arith.constant 0.000000e+00 : f32
    %105 = vector.broadcast %cst_56 : f32 to vector<1x16x256xf32>
    %106 = arith.maximumf %104, %105 : vector<1x16x256xf32>
    %c0_57 = arith.constant 0 : index
    %c0_58 = arith.constant 0 : index
    %c0_59 = arith.constant 0 : index
    %107 = vector.load %arg5[%c0_57, %c0_58, %c0_59] : memref<1x16x256xf32, #tpu.memory_space<vmem>>, vector<1x16x256xf32>
    tpu.vector_store %arg5[%c0_57, %c0_58, %c0_59], %106 {strides = array<i32>} : memref<1x16x256xf32, #tpu.memory_space<vmem>>, vector<1x16x256xf32>,
    return
  }
  func.func @transform_0(%arg0: i32, %arg1: i32) -> (i32, i32, i32) {
    %c0_i32 = arith.constant 0 : i32
    %c0_i32_0 = arith.constant 0 : i32
    return %arg0, %arg1, %c0_i32 : i32, i32, i32
  }
  func.func @transform_1(%arg0: i32, %arg1: i32) -> (i32, i32, i32) {
    %c0_i32 = arith.constant 0 : i32
    %c0_i32_0 = arith.constant 0 : i32
    %c0_i32_1 = arith.constant 0 : i32
    return %c0_i32, %arg1, %c0_i32_0 : i32, i32, i32
  }
  func.func @transform_2(%arg0: i32, %arg1: i32) -> (i32, i32) {
    %c0_i32 = arith.constant 0 : i32
    %c0_i32_0 = arith.constant 0 : i32
    return %arg1, %c0_i32 : i32, i32
  }
  func.func @transform_3(%arg0: i32, %arg1: i32) -> (i32, i32, i32) {
    %c0_i32 = arith.constant 0 : i32
    %c0_i32_0 = arith.constant 0 : i32
    return %arg0, %arg1, %c0_i32 : i32, i32, i32
  }
}

</mosaic_0001>

<llo_original>
// kernel: gconv_bn_relu_pallas.1
$region0: #{gconv_bn_relu_pallas.1}
  #allocation0 [shape = 'u32[]', space=smem, size = 0x4, offset = 0x4, fixed_abs, tag = 'smem constant byte address 0x4 - core index']
  #allocation1 [shape = 'u32[144,128]{1,0:T(1,128)}', space=vmem, size = 0x12000, scoped, tag = 'internal scratch']
  #allocation2 [shape = 'f32[1,16,512]{2,1,0:T(8,128)}', space=vmem, size = 0x8000, scoped, tag = 'scratch operand']
  %s0 = inlined_call_operand.vmem [shape: f32[2,32,256], index: 0, kind: input, shape index: {}]
  %s1 = inlined_call_operand.vmem [shape: f32[9,32,1], index: 1, kind: input, shape index: {}]
  %s2 = inlined_call_operand.vmem [shape: f32[32,1], index: 2, kind: input, shape index: {}]
  %s3 = inlined_call_operand.vmem [shape: f32[2,32,256], index: 3, kind: output, shape index: {}]
  %s4 = sld [smem:[#allocation0]]
  $region83: #{gconv_bn_relu_pallas.1} parent=0
    _
  %s6 = ssub.s32 1, %s4
  %s7 = scalar_select 0, %s6, %s4
  $region1: #{gconv_bn_relu_pallas.1} parent=0
    #allocation3 [shape = 'u8[147456]{0}', space=vmem, size = 0x24000, scoped, tag = 'input window, operand 1']
    loop: start=0, step=1, limit=6
    $region2: #{gconv_bn_relu_pallas.1} parent=1 // loop_pre_header
      _
    $region3: #{gconv_bn_relu_pallas.1} parent=1 // loop_header
      %s9 = sphi 0, %s13
      %p10 = scmp.ge.s32.totalorder %s9, 6
      %s16 = sphi 0, %s28
      %s17 = sphi 0, %s24
      %s18 = sphi 0, %s16
      %s19 = sphi 0, %s17
      %s20 = sphi 0, %s18
      %s21 = sphi 0, %s19
      %s33 = sphi 0, %s35
      %s36 = sphi 0, %s33
      %s37 = sphi 0, %s36
      %s53 = sphi 0, %s37
      %s59 = sphi 0, %s61
      %s62 = sphi 0, %s59
      %s63 = sphi 0, %s62
      %s79 = sphi 0, %s63
      %s85 = sphi 0, %s87
      %s88 = sphi 0, %s85
      %s89 = sphi 0, %s88
      %s105 = sphi 0, %s89
      %s113 = sphi 0, %s115
      %s116 = sphi 0, %s113
      %s117 = sphi 0, %s116
      %s133 = sphi 0, %s117
    $region4: #{gconv_bn_relu_pallas.1} parent=1 // loop_header_branch
      %12 = sbr.rel (%p10) target = $region8
    $region5: #{gconv_bn_relu_pallas.1} parent=1 // loop_body
      %s14 = ssub.s32 %s9, 1
      %s15 = ssub.s32 %s9, 2
      %s22 = sadd.s32 1, %s17
      %p23 = scmp.ge.s32.totalorder %s22, 2
      %s24 = scalar_select %p23, 0, %s22
      %s25 = sadd.s32 1, %s16
      %s26 = scalar_select %p23, %s25, %s16
      %p27 = scmp.ge.s32.totalorder %s26, 2
      %s28 = scalar_select %p27, 0, %s26
      %s29 = ssub.s32 %s16, %s28
      %s30 = ssub.s32 %s17, %s24
      %s31 = sor.u32 %s29, %s30
      %p32 = scmp.eq.s32.totalorder %s31, 0
      %s34 = sadd.s32 %s33, 1
      %s35 = scalar_select %p32, %s33, %s34
      %p38 = pneg %p32
      %p39 = scmp.eq.s32.totalorder %s9, 3
      %p40 = por %p38, %p39
      %p41 = scmp.ne.s32.totalorder %s33, %s36
      %p42 = scmp.eq.s32.totalorder %s9, 0
      %p43 = por %p41, %p42
      %p44 = scmp.ne.s32.totalorder %s33, %s36
      %p45 = scmp.eq.s32.totalorder %s14, 3
      %p46 = por %p44, %p45
      %p47 = scmp.ne.s32.totalorder %s36, %s37
      %p48 = scmp.eq.s32.totalorder %s14, 0
      %p49 = por %p47, %p48
      %p50 = scmp.ne.s32.totalorder %s36, %s37
      %p51 = scmp.eq.s32.totalorder %s15, 3
      %p52 = por %p50, %p51
      %p54 = scmp.ne.s32.totalorder %s37, %s53
      %p55 = scmp.eq.s32.totalorder %s15, 0
      %p56 = por %p54, %p55
      %s57 = ssub.s32 %s17, %s24
      %p58 = scmp.eq.s32.totalorder %s57, 0
      %s60 = sadd.s32 %s59, 1
      %s61 = scalar_select %p58, %s59, %s60
      %p64 = pneg %p58
      %p65 = scmp.eq.s32.totalorder %s9, 3
      %p66 = por %p64, %p65
      %p67 = scmp.ne.s32.totalorder %s59, %s62
      %p68 = scmp.eq.s32.totalorder %s9, 0
      %p69 = por %p67, %p68
      %p70 = scmp.ne.s32.totalorder %s59, %s62
      %p71 = scmp.eq.s32.totalorder %s14, 3
      %p72 = por %p70, %p71
      %p73 = scmp.ne.s32.totalorder %s62, %s63
      %p74 = scmp.eq.s32.totalorder %s14, 0
      %p75 = por %p73, %p74
      %p76 = scmp.ne.s32.totalorder %s62, %s63
      %p77 = scmp.eq.s32.totalorder %s15, 3
      %p78 = por %p76, %p77
      %p80 = scmp.ne.s32.totalorder %s63, %s79
      %p81 = scmp.eq.s32.totalorder %s15, 0
      %p82 = por %p80, %p81
      %s83 = ssub.s32 %s17, %s24
      %p84 = scmp.eq.s32.totalorder %s83, 0
      %s86 = sadd.s32 %s85, 1
      %s87 = scalar_select %p84, %s85, %s86
      %p90 = pneg %p84
      %p91 = scmp.eq.s32.totalorder %s9, 3
      %p92 = por %p90, %p91
      %p93 = scmp.ne.s32.totalorder %s85, %s88
      %p94 = scmp.eq.s32.totalorder %s9, 0
      %p95 = por %p93, %p94
      %p96 = scmp.ne.s32.totalorder %s85, %s88
      %p97 = scmp.eq.s32.totalorder %s14, 3
      %p98 = por %p96, %p97
      %p99 = scmp.ne.s32.totalorder %s88, %s89
      %p100 = scmp.eq.s32.totalorder %s14, 0
      %p101 = por %p99, %p100
      %p102 = scmp.ne.s32.totalorder %s88, %s89
      %p103 = scmp.eq.s32.totalorder %s15, 3
      %p104 = por %p102, %p103
      %p106 = scmp.ne.s32.totalorder %s89, %s105
      %p107 = scmp.eq.s32.totalorder %s15, 0
      %p108 = por %p106, %p107
      %s109 = ssub.s32 %s16, %s28
      %s110 = ssub.s32 %s17, %s24
      %s111 = sor.u32 %s109, %s110
      %p112 = scmp.eq.s32.totalorder %s111, 0
      %s114 = sadd.s32 %s113, 1
      %s115 = scalar_select %p112, %s113, %s114
      %p118 = pneg %p112
      %p119 = scmp.eq.s32.totalorder %s9, 3
      %p120 = por %p118, %p119
      %p121 = scmp.ne.s32.totalorder %s113, %s116
      %p122 = scmp.eq.s32.totalorder %s9, 0
      %p123 = por %p121, %p122
      %p124 = scmp.ne.s32.totalorder %s113, %s116
      %p125 = scmp.eq.s32.totalorder %s14, 3
      %p126 = por %p124, %p125
      %p127 = scmp.ne.s32.totalorder %s116, %s117
      %p128 = scmp.eq.s32.totalorder %s14, 0
      %p129 = por %p127, %p128
      %p130 = scmp.ne.s32.totalorder %s116, %s117
      %p131 = scmp.eq.s32.totalorder %s15, 3
      %p132 = por %p130, %p131
      %p134 = scmp.ne.s32.totalorder %s117, %s133
      %p135 = scmp.eq.s32.totalorder %s15, 0
      %p136 = por %p134, %p135
      %p137 = scmp.le.s32.totalorder 1, %s9
      %p138 = scmp.lt.s32.totalorder %s9, 5
      %p139 = pnand %p137, %p138
      %p140 = pneg %p139
      // Predicated region
      $region9: #{gconv_bn_relu_pallas.1} parent=5 // pred_check
        _
      $region10: #{gconv_bn_relu_pallas.1} parent=5 // pred_check_branch
        %142 = sbr.rel (%p139) target = $region12
      $region11: #{gconv_bn_relu_pallas.1} parent=5 // pred_region
        %s143 = ssub.s32 %s9, 1
      $region12: #{gconv_bn_relu_pallas.1} parent=5 // pred_fallthru
        _
      %p144 = scmp.lt.s32.totalorder %s9, 4
      // Predicated region
      $region13: #{gconv_bn_relu_pallas.1} parent=5 // pred_check
        %p145 = pneg %p144
      $region14: #{gconv_bn_relu_pallas.1} parent=5 // pred_check_branch
        %147 = sbr.rel (%p145) target = $region16
      $region15: #{gconv_bn_relu_pallas.1} parent=5 // pred_region
        // Predicated region
        $region17: #{gconv_bn_relu_pallas.1} parent=15 // pred_check
          %p148 = pneg %p43
        $region18: #{gconv_bn_relu_pallas.1} parent=15 // pred_check_branch
          %150 = sbr.rel (%p148) target = $region20
        $region19: #{gconv_bn_relu_pallas.1} parent=15 // pred_region
          %s151 = smul.u32 2, %s17
          %p152 = scmp.lt.s32.totalorder %s16, 1
          %s153 = scalar_select %p152, %s16, 1
          %p154 = scmp.lt.s32.totalorder %s151, 3
          %s155 = scalar_select %p154, %s151, 3
          %s156 = smul.addr %s155, 2
          %s157 = smul.addr %s153, 8
          %s158 = sadd.s32 %s156, %s157
          %s159 = smul.addr %s158, 8
          %s160 = scalar_lea.vmem %s0, %s159
          %s161 = smul.u32 2, %s17
        $region20: #{gconv_bn_relu_pallas.1} parent=15 // pred_fallthru
          _
        // Predicated region
        $region21: #{gconv_bn_relu_pallas.1} parent=15 // pred_check
          %p162 = pneg %p69
        $region22: #{gconv_bn_relu_pallas.1} parent=15 // pred_check_branch
          %164 = sbr.rel (%p162) target = $region24
        $region23: #{gconv_bn_relu_pallas.1} parent=15 // pred_region
          %s165 = sand.u32 %s59, 1
          %s166 = sand.u32 %s59, 1
          %s167 = smul.addr %s166, 144
          %s168 = scalar_lea.vmem [#allocation3], %s167
          %s169 = smul.u32 2, %s17
          %s170 = smul.addr %s169, 8
          %s171 = scalar_lea.vmem %s1, %s170
          // Predicated region
          $region25: #{gconv_bn_relu_pallas.1} parent=23 // pred_check
            _
          $region26: #{gconv_bn_relu_pallas.1} parent=23 // pred_check_branch
            %173 = sbr.rel (0) target = $region28
          $region27: #{gconv_bn_relu_pallas.1} parent=23 // pred_region
            // Predicated region
            $region29: #{gconv_bn_relu_pallas.1} parent=27 // pred_check
              _
            $region30: #{gconv_bn_relu_pallas.1} parent=27 // pred_check_branch
              %175 = sbr.rel (0) target = $region32
            $region31: #{gconv_bn_relu_pallas.1} parent=27 // pred_region
              // Predicated region
              $region44: #{gconv_bn_relu_pallas.1} parent=31 // pred_check
                _
              $region45: #{gconv_bn_relu_pallas.1} parent=31 // pred_check_branch
                %224 = sbr.rel (0) target = $region47
              $region46: #{gconv_bn_relu_pallas.1} parent=31 // pred_region
                loop: start=0, step=1, limit=1
                $region48: #{gconv_bn_relu_pallas.1} parent=46 // loop_pre_header
                  _
                $region49: #{gconv_bn_relu_pallas.1} parent=46 // loop_header
                  %s226 = sphi 0, %s230
                  %p227 = scmp.ge.s32.totalorder %s226, 1
                  %s231 = sphi %s171, %s171
                  %s232 = sphi %s168, %s168
                $region50: #{gconv_bn_relu_pallas.1} parent=46 // loop_header_branch
                  %229 = sbr.rel (%p227) target = $region54
                $region51: #{gconv_bn_relu_pallas.1} parent=46 // loop_body
                  %v233 = vld [vmem:[%s231] sm:$0xff]
                  %234 = vst [vmem:[%s232] sm:$0xff] %v233
                  %v235 = vld [vmem:[%s231 + $0x8] sm:$0xff]
                  %236 = vst [vmem:[%s232 + $0x8] sm:$0xff] %v235
                  %v237 = vld [vmem:[%s231 + $0x20] sm:$0xff]
                  %238 = vst [vmem:[%s232 + $0x10] sm:$0xff] %v237
                  %v239 = vld [vmem:[%s231 + $0x28] sm:$0xff]
                  %240 = vst [vmem:[%s232 + $0x18] sm:$0xff] %v239
                  %v241 = vld [vmem:[%s231 + $0x40] sm:$0xff]
                  %242 = vst [vmem:[%s232 + $0x20] sm:$0xff] %v241
                  %v243 = vld [vmem:[%s231 + $0x48] sm:$0xff]
                  %244 = vst [vmem:[%s232 + $0x28] sm:$0xff] %v243
                  %v245 = vld [vmem:[%s231 + $0x60] sm:$0xff]
                  %246 = vst [vmem:[%s232 + $0x30] sm:$0xff] %v245
                  %v247 = vld [vmem:[%s231 + $0x68] sm:$0xff]
                  %248 = vst [vmem:[%s232 + $0x38] sm:$0xff] %v247
                  %v249 = vld [vmem:[%s231 + $0x80] sm:$0xff]
                  %250 = vst [vmem:[%s232 + $0x40] sm:$0xff] %v249
                  %v251 = vld [vmem:[%s231 + $0x88] sm:$0xff]
                  %252 = vst [vmem:[%s232 + $0x48] sm:$0xff] %v251
                  %v253 = vld [vmem:[%s231 + $0xa0] sm:$0xff]
                  %254 = vst [vmem:[%s232 + $0x50] sm:$0xff] %v253
                  %v255 = vld [vmem:[%s231 + $0xa8] sm:$0xff]
                  %256 = vst [vmem:[%s232 + $0x58] sm:$0xff] %v255
                  %v257 = vld [vmem:[%s231 + $0xc0] sm:$0xff]
                  %258 = vst [vmem:[%s232 + $0x60] sm:$0xff] %v257
                  %v259 = vld [vmem:[%s231 + $0xc8] sm:$0xff]
                  %260 = vst [vmem:[%s232 + $0x68] sm:$0xff] %v259
                  %v261 = vld [vmem:[%s231 + $0xe0] sm:$0xff]
                  %262 = vst [vmem:[%s232 + $0x70] sm:$0xff] %v261
                  %v263 = vld [vmem:[%s231 + $0xe8] sm:$0xff]
                  %264 = vst [vmem:[%s232 + $0x78] sm:$0xff] %v263
                  %v265 = vld [vmem:[%s231 + $0x100] sm:$0xff]
                  %266 = vst [vmem:[%s232 + $0x80] sm:$0xff] %v265
                  %v267 = vld [vmem:[%s231 + $0x108] sm:$0xff]
                  %268 = vst [vmem:[%s232 + $0x88] sm:$0xff] %v267
                $region52: #{gconv_bn_relu_pallas.1} parent=46 // loop_footer
                  %s230 = sadd.s32 1, %s226
                $region53: #{gconv_bn_relu_pallas.1} parent=46 // loop_footer_branch
                  %225 = sbr.rel target = $region49
                $region54: #{gconv_bn_relu_pallas.1} parent=46 // loop_exit
                  _
              $region47: #{gconv_bn_relu_pallas.1} parent=31 // pred_fallthru
                _
              // Predicated region
              $region55: #{gconv_bn_relu_pallas.1} parent=31 // pred_check
                _
              $region56: #{gconv_bn_relu_pallas.1} parent=31 // pred_check_branch
                %270 = sbr.rel target = $region58
              $region57: #{gconv_bn_relu_pallas.1} parent=31 // pred_region
                _
              $region58: #{gconv_bn_relu_pallas.1} parent=31 // pred_fallthru
                _
            $region32: #{gconv_bn_relu_pallas.1} parent=27 // pred_fallthru
              _
            // Predicated region
            $region33: #{gconv_bn_relu_pallas.1} parent=27 // pred_check
              _
            $region34: #{gconv_bn_relu_pallas.1} parent=27 // pred_check_branch
              %177 = sbr.rel target = $region36
            $region35: #{gconv_bn_relu_pallas.1} parent=27 // pred_region
              loop: start=0, step=1, limit=1
              $region37: #{gconv_bn_relu_pallas.1} parent=35 // loop_pre_header
                _
              $region38: #{gconv_bn_relu_pallas.1} parent=35 // loop_header
                %s180 = sphi 0, %s184
                %p181 = scmp.ge.s32.totalorder %s180, 1
                %s185 = sphi %s171, %s171
                %s186 = sphi %s168, %s168
              $region39: #{gconv_bn_relu_pallas.1} parent=35 // loop_header_branch
                %183 = sbr.rel (%p181) target = $region43
              $region40: #{gconv_bn_relu_pallas.1} parent=35 // loop_body
                %v187 = vld [vmem:[%s185] sm:$0xff]
                %188 = vst [vmem:[%s186] sm:$0xff] %v187
                %v189 = vld [vmem:[%s185 + $0x8] sm:$0xff]
                %190 = vst [vmem:[%s186 + $0x8] sm:$0xff] %v189
                %v191 = vld [vmem:[%s185 + $0x20] sm:$0xff]
                %192 = vst [vmem:[%s186 + $0x10] sm:$0xff] %v191
                %v193 = vld [vmem:[%s185 + $0x28] sm:$0xff]
                %194 = vst [vmem:[%s186 + $0x18] sm:$0xff] %v193
                %v195 = vld [vmem:[%s185 + $0x40] sm:$0xff]
                %196 = vst [vmem:[%s186 + $0x20] sm:$0xff] %v195
                %v197 = vld [vmem:[%s185 + $0x48] sm:$0xff]
                %198 = vst [vmem:[%s186 + $0x28] sm:$0xff] %v197
                %v199 = vld [vmem:[%s185 + $0x60] sm:$0xff]
                %200 = vst [vmem:[%s186 + $0x30] sm:$0xff] %v199
                %v201 = vld [vmem:[%s185 + $0x68] sm:$0xff]
                %202 = vst [vmem:[%s186 + $0x38] sm:$0xff] %v201
                %v203 = vld [vmem:[%s185 + $0x80] sm:$0xff]
                %204 = vst [vmem:[%s186 + $0x40] sm:$0xff] %v203
                %v205 = vld [vmem:[%s185 + $0x88] sm:$0xff]
                %206 = vst [vmem:[%s186 + $0x48] sm:$0xff] %v205
                %v207 = vld [vmem:[%s185 + $0xa0] sm:$0xff]
                %208 = vst [vmem:[%s186 + $0x50] sm:$0xff] %v207
                %v209 = vld [vmem:[%s185 + $0xa8] sm:$0xff]
                %210 = vst [vmem:[%s186 + $0x58] sm:$0xff] %v209
                %v211 = vld [vmem:[%s185 + $0xc0] sm:$0xff]
                %212 = vst [vmem:[%s186 + $0x60] sm:$0xff] %v211
                %v213 = vld [vmem:[%s185 + $0xc8] sm:$0xff]
                %214 = vst [vmem:[%s186 + $0x68] sm:$0xff] %v213
                %v215 = vld [vmem:[%s185 + $0xe0] sm:$0xff]
                %216 = vst [vmem:[%s186 + $0x70] sm:$0xff] %v215
                %v217 = vld [vmem:[%s185 + $0xe8] sm:$0xff]
                %218 = vst [vmem:[%s186 + $0x78] sm:$0xff] %v217
                %v219 = vld [vmem:[%s185 + $0x100] sm:$0xff]
                %220 = vst [vmem:[%s186 + $0x80] sm:$0xff] %v219
                %v221 = vld [vmem:[%s185 + $0x108] sm:$0xff]
                %222 = vst [vmem:[%s186 + $0x88] sm:$0xff] %v221
              $region41: #{gconv_bn_relu_pallas.1} parent=35 // loop_footer
                %s184 = sadd.s32 1, %s180
              $region42: #{gconv_bn_relu_pallas.1} parent=35 // loop_footer_branch
                %179 = sbr.rel target = $region38
              $region43: #{gconv_bn_relu_pallas.1} parent=35 // loop_exit
                _
            $region36: #{gconv_bn_relu_pallas.1} parent=27 // pred_fallthru
              _
          $region28: #{gconv_bn_relu_pallas.1} parent=23 // pred_fallthru
            _
          %271 = vnop
        $region24: #{gconv_bn_relu_pallas.1} parent=15 // pred_fallthru
          _
        // Predicated region
        $region59: #{gconv_bn_relu_pallas.1} parent=15 // pred_check
          %p272 = pneg %p95
        $region60: #{gconv_bn_relu_pallas.1} parent=15 // pred_check_branch
          %274 = sbr.rel (%p272) target = $region62
        $region61: #{gconv_bn_relu_pallas.1} parent=15 // pred_region
          %s275 = smul.u32 2, %s17
          %p276 = scmp.lt.s32.totalorder %s275, 3
          %s277 = scalar_select %p276, %s275, 3
          %s278 = smul.addr %s277, 8
          %s279 = scalar_lea.vmem %s2, %s278
          %s280 = smul.u32 2, %s17
        $region62: #{gconv_bn_relu_pallas.1} parent=15 // pred_fallthru
          _
      $region16: #{gconv_bn_relu_pallas.1} parent=5 // pred_fallthru
        _
      %p281 = scmp.le.s32.totalorder 1, %s9
      %p282 = scmp.lt.s32.totalorder %s9, 5
      %p283 = pnand %p281, %p282
      %p284 = pneg %p283
      // Predicated region
      $region63: #{gconv_bn_relu_pallas.1} parent=5 // pred_check
        _
      $region64: #{gconv_bn_relu_pallas.1} parent=5 // pred_check_branch
        %286 = sbr.rel (%p283) target = $region66
      $region65: #{gconv_bn_relu_pallas.1} parent=5 // pred_region
        %s287 = ssub.s32 %s9, 1
        %s288 = sand.u32 %s62, 1
        %s289 = sand.u32 %s62, 1
        %s290 = smul.addr %s289, 144
        %s291 = scalar_lea.vmem [#allocation3], %s290
        // Predicated region
        $region67: #{gconv_bn_relu_pallas.1} parent=65 // pred_check
          %p292 = pneg %p75
        $region68: #{gconv_bn_relu_pallas.1} parent=65 // pred_check_branch
          %294 = sbr.rel (%p292) target = $region70
        $region69: #{gconv_bn_relu_pallas.1} parent=65 // pred_region
          _
        $region70: #{gconv_bn_relu_pallas.1} parent=65 // pred_fallthru
          _
        %s295 = smul.u32 2, %s19
        %p296 = scmp.lt.s32.totalorder %s18, 1
        %s297 = scalar_select %p296, %s18, 1
        %p298 = scmp.lt.s32.totalorder %s295, 3
        %s299 = scalar_select %p298, %s295, 3
        %s300 = smul.addr %s299, 2
        %s301 = smul.addr %s297, 8
        %s302 = sadd.s32 %s300, %s301
        %s303 = smul.addr %s302, 8
        %s304 = scalar_lea.vmem %s0, %s303
        %p305 = pneg %p49
        %p306 = pneg %p46
        %s307 = sand.u32 %s62, 1
        %s308 = sand.u32 %s62, 1
        %s309 = smul.addr %s308, 144
        %s310 = scalar_lea.vmem [#allocation3], %s309
        %p311 = pneg %p75
        %p312 = pneg %p72
        %s313 = smul.u32 2, %s19
        %p314 = scmp.lt.s32.totalorder %s313, 3
        %s315 = scalar_select %p314, %s313, 3
        %s316 = smul.addr %s315, 8
        %s317 = scalar_lea.vmem %s2, %s316
        %p318 = pneg %p101
        %p319 = pneg %p98
        %p320 = pneg %p129
        %p321 = pneg %p126
        %s322 = smul.u32 2, %s19
        %p323 = scmp.lt.s32.totalorder %s18, 1
        %s324 = scalar_select %p323, %s18, 1
        %p325 = scmp.lt.s32.totalorder %s322, 3
        %s326 = scalar_select %p325, %s322, 3
        %s327 = smul.addr %s326, 2
        %s328 = smul.addr %s324, 8
        %s329 = sadd.s32 %s327, %s328
        %s330 = smul.addr %s329, 8
        %s331 = scalar_lea.vmem %s3, %s330
        %s332 = smul.u32 2, %s19
        %p333 = scmp.lt.s32.totalorder %s18, 1
        %s334 = scalar_select %p333, %s18, 1
        %p335 = scmp.lt.s32.totalorder %s332, 3
        %s336 = scalar_select %p335, %s332, 3
        %s337 = smul.addr %s336, 2
        %s338 = smul.addr %s334, 8
        %s339 = sadd.s32 %s337, %s338
        %s340 = smul.addr %s339, 8
        %s341 = scalar_lea.vmem %s0, %s340
        %s342 = smul.u32 2, %s19
        %s343 = smul.u32 2, %s19
        %s344 = smul.u32 2, %s19
        %p345 = scmp.lt.s32.totalorder %s344, 3
        %s346 = scalar_select %p345, %s344, 3
        %s347 = smul.addr %s346, 8
        %s348 = scalar_lea.vmem %s2, %s347
        %s349 = smul.u32 2, %s19
        %s350 = smul.u32 2, %s19
        %p351 = scmp.lt.s32.totalorder %s18, 1
        %s352 = scalar_select %p351, %s18, 1
        %p353 = scmp.lt.s32.totalorder %s350, 3
        %s354 = scalar_select %p353, %s350, 3
        %s355 = smul.addr %s354, 2
        %s356 = smul.addr %s352, 8
        %s357 = sadd.s32 %s355, %s356
        %s358 = smul.addr %s357, 8
        %s359 = scalar_lea.vmem %s3, %s358
        %s360 = smul.u32 2, %s19
        %361 = vst [vmem:[#allocation2] sm:$0xff] 0.0
        %362 = vst [vmem:[#allocation2 + $0x8] sm:$0xff] 0.0
        %363 = vst [vmem:[#allocation2 + $0x10] sm:$0xff] 0.0
        %364 = vst [vmem:[#allocation2 + $0x18] sm:$0xff] 0.0
        %365 = vst [vmem:[#allocation2 + $0x20] sm:$0xff] 0.0
        %366 = vst [vmem:[#allocation2 + $0x28] sm:$0xff] 0.0
        %367 = vst [vmem:[#allocation2 + $0x30] sm:$0xff] 0.0
        %368 = vst [vmem:[#allocation2 + $0x38] sm:$0xff] 0.0
        %v369 = vld [vmem:[%s341] sm:$0xff]
        %v370 = vld [vmem:[%s341 + $0x8] sm:$0xff]
        %v371 = vld [vmem:[%s341 + $0x10] sm:$0xff]
        %v372 = vld [vmem:[%s341 + $0x18] sm:$0xff]
        %373 = vst [vmem:[#allocation2 + $0x8] sm:$0xff] %v369
        %374 = vst [vmem:[#allocation2 + $0x10] sm:$0xff] %v370
        %375 = vst [vmem:[#allocation2 + $0x28] sm:$0xff] %v371
        %376 = vst [vmem:[#allocation2 + $0x30] sm:$0xff] %v372
        %v377 = vlaneseq
        %v378 = vand.u32 %v377, 127
        %v379 = vadd.s32 %v378, 128
        %vm380 = vcmp.lt.s32.totalorder %v378, 0
        %v381 = vsub.s32 0, %v378
        %v382 = vsel %vm380, %v381, %v378
        %v383 = vshrl.u32 %v382, 4
        %v384 = vand.u32 %v382, 15
        %v385 = vsub.s32 0, %v384
        %v386 = vsel %vm380, %v385, %v384
        %vm387 = vcmp.lt.s32.totalorder %v379, 0
        %v388 = vsub.s32 0, %v379
        %v389 = vsel %vm387, %v388, %v379
        %v390 = vshrl.u32 %v389, 4
        %v391 = vand.u32 %v389, 15
        %v392 = vsub.s32 0, %v391
        %v393 = vsel %vm387, %v392, %v391
        %vm394 = vcmp.ne.s32.totalorder %v386, 0
        %vm395 = vcmp.ne.s32.totalorder %v393, 0
        %vm396 = vcmp.lt.s32.totalorder %v386, 0
        %vm397 = vcmp.lt.s32.totalorder %v393, 0
        %vm398 = vmand %vm396, %vm394
        %vm399 = vmand %vm397, %vm395
        %v400 = vadd.s32 %v386, 16
        %v401 = vadd.s32 %v393, 16
        %v402 = vsel %vm398, %v400, %v386
        %v403 = vsel %vm399, %v401, %v393
        %vm404 = vcmp.ne.s32.totalorder %v402, 0
        %vm405 = vcmp.ne.s32.totalorder %v403, 0
        %v406 = vsel %vm404, 1, 0
        %v407 = vsel %vm405, 1, 0
        %vm408 = vcmp.eq.s32.totalorder %v406, 1
        %vm409 = vcmp.eq.s32.totalorder %v407, 1
        %vm410 = vcmp.ne.s32.totalorder %v402, 15
        %vm411 = vcmp.ne.s32.totalorder %v403, 15
        %v412 = vsel %vm410, 1, 0
        %v413 = vsel %vm411, 1, 0
        %vm414 = vcmp.eq.s32.totalorder %v412, 1
        %vm415 = vcmp.eq.s32.totalorder %v413, 1
        %v416 = vld [vmem:[#allocation2] sm:$0xff]
        %v417 = vld [vmem:[#allocation2 + $0x8] sm:$0xff]
        %v418 = vld [vmem:[#allocation2 + $0x10] sm:$0xff]
        %v419 = vld [vmem:[#allocation2 + $0x20] sm:$0xff]
        %v420 = vld [vmem:[#allocation2 + $0x28] sm:$0xff]
        %v421 = vld [vmem:[#allocation2 + $0x30] sm:$0xff]
        %v422 = vld [vmem:[%s291] sm:$0xff]
        %v423 = vld [vmem:[%s291 + $0x8] sm:$0xff]
        %425 = vset.pattern.permute.xlu0 0
        %426 = vperm.xlu0 %425, %v422
        %v427 = vpop.permute.xlu0 %426
        %430 = vset.pattern.permute.xlu0 0
        %431 = vperm.xlu0 %430, %v423
        %v432 = vpop.permute.xlu0 %431
        %v434 = vmul.f32 %v416, %v427
        %v435 = vmul.f32 %v417, %v427
        %v436 = vmul.f32 %v418, %v427
        %v437 = vmul.f32 %v419, %v432
        %v438 = vmul.f32 %v420, %v432
        %v439 = vmul.f32 %v421, %v432
        %v440 = vadd.f32 %v434, 0.0
        %v441 = vadd.f32 %v435, 0.0
        %v442 = vadd.f32 %v436, 0.0
        %v443 = vadd.f32 %v437, 0.0
        %v444 = vadd.f32 %v438, 0.0
        %v445 = vadd.f32 %v439, 0.0
        %s446 = scalar_lea.vmem %s291, 16 [#allocation3]
        %v447 = vld [vmem:[%s446] sm:$0xff]
        %v448 = vld [vmem:[%s446 + $0x8] sm:$0xff]
        %450 = vset.pattern.permute.xlu0 0
        %451 = vperm.xlu0 %450, %v447
        %v452 = vpop.permute.xlu0 %451
        %455 = vset.pattern.permute.xlu0 0
        %456 = vperm.xlu0 %455, %v448
        %v457 = vpop.permute.xlu0 %456
        %v459 = vmul.f32 %v416, %v452
        %v460 = vmul.f32 %v417, %v452
        %v461 = vmul.f32 %v418, %v452
        %v462 = vmul.f32 %v419, %v457
        %v463 = vmul.f32 %v420, %v457
        %v464 = vmul.f32 %v421, %v457
        %v465 = vadd.f32 %v459, 0.0
        %v466 = vadd.f32 %v460, 0.0
        %v467 = vadd.f32 %v461, 0.0
        %v468 = vadd.f32 %v462, 0.0
        %v469 = vadd.f32 %v463, 0.0
        %v470 = vadd.f32 %v464, 0.0
        %s471 = scalar_lea.vmem %s291, 32 [#allocation3]
        %v472 = vld [vmem:[%s471] sm:$0xff]
        %v473 = vld [vmem:[%s471 + $0x8] sm:$0xff]
        %475 = vset.pattern.permute.xlu0 0
        %476 = vperm.xlu0 %475, %v472
        %v477 = vpop.permute.xlu0 %476
        %480 = vset.pattern.permute.xlu0 0
        %481 = vperm.xlu0 %480, %v473
        %v482 = vpop.permute.xlu0 %481
        %v484 = vmul.f32 %v416, %v477
        %v485 = vmul.f32 %v417, %v477
        %v486 = vmul.f32 %v418, %v477
        %v487 = vmul.f32 %v419, %v482
        %v488 = vmul.f32 %v420, %v482
        %v489 = vmul.f32 %v421, %v482
        %v490 = vadd.f32 %v484, 0.0
        %v491 = vadd.f32 %v485, 0.0
        %v492 = vadd.f32 %v486, 0.0
        %v493 = vadd.f32 %v487, 0.0
        %v494 = vadd.f32 %v488, 0.0
        %v495 = vadd.f32 %v489, 0.0
        %s496 = scalar_lea.vmem %s291, 48 [#allocation3]
        %v497 = vld [vmem:[%s496] sm:$0xff]
        %v498 = vld [vmem:[%s496 + $0x8] sm:$0xff]
        %500 = vset.pattern.permute.xlu0 0
        %501 = vperm.xlu0 %500, %v497
        %v502 = vpop.permute.xlu0 %501
        %505 = vset.pattern.permute.xlu0 0
        %506 = vperm.xlu0 %505, %v498
        %v507 = vpop.permute.xlu0 %506
        %v509 = vmul.f32 %v416, %v502
        %v510 = vmul.f32 %v417, %v502
        %v511 = vmul.f32 %v418, %v502
        %v512 = vmul.f32 %v419, %v507
        %v513 = vmul.f32 %v420, %v507
        %v514 = vmul.f32 %v421, %v507
        %521 = vrot.lane.b32.xlu0 %v509, 112
        %v522 = vpop.permute.xlu0 %521
        %523 = vrot.lane.b32.xlu0 %v510, 112
        %v524 = vpop.permute.xlu0 %523
        %525 = vrot.lane.b32.xlu0 %v511, 112
        %v526 = vpop.permute.xlu0 %525
        %527 = vrot.lane.b32.xlu0 %v512, 112
        %v528 = vpop.permute.xlu0 %527
        %529 = vrot.lane.b32.xlu0 %v513, 112
        %v530 = vpop.permute.xlu0 %529
        %531 = vrot.lane.b32.xlu0 %v514, 112
        %v532 = vpop.permute.xlu0 %531
        %vm533 = vcmask 916480
        %v534 = vsel %vm533, %v522, %v524
        %v535 = vsel %vm533, %v524, %v526
        %v536 = vsel %vm533, %v528, %v530
        %v537 = vsel %vm533, %v530, %v532
        %v544 = vadd.f32 %v440, %v534
        %v545 = vadd.f32 %v441, %v535
        %v546 = vadd.f32 %v442, %v526
        %v547 = vadd.f32 %v443, %v536
        %v548 = vadd.f32 %v444, %v537
        %v549 = vadd.f32 %v445, %v532
        %s550 = scalar_lea.vmem %s291, 64 [#allocation3]
        %v551 = vld [vmem:[%s550] sm:$0xff]
        %v552 = vld [vmem:[%s550 + $0x8] sm:$0xff]
        %554 = vset.pattern.permute.xlu0 0
        %555 = vperm.xlu0 %554, %v551
        %v556 = vpop.permute.xlu0 %555
        %559 = vset.pattern.permute.xlu0 0
        %560 = vperm.xlu0 %559, %v552
        %v561 = vpop.permute.xlu0 %560
        %v563 = vmul.f32 %v417, %v556
        %v564 = vmul.f32 %v418, %v556
        %v565 = vmul.f32 %v420, %v561
        %v566 = vmul.f32 %v421, %v561
        %571 = vrot.lane.b32.xlu0 %v563, 112
        %v572 = vpop.permute.xlu0 %571
        %573 = vrot.lane.b32.xlu0 %v564, 112
        %v574 = vpop.permute.xlu0 %573
        %575 = vrot.lane.b32.xlu0 %v565, 112
        %v576 = vpop.permute.xlu0 %575
        %577 = vrot.lane.b32.xlu0 %v566, 112
        %v578 = vpop.permute.xlu0 %577
        %v579 = vsel %vm533, %v572, %v574
        %v580 = vsel %vm533, %v576, %v578
        %v587 = vadd.f32 %v465, %v572
        %v588 = vadd.f32 %v466, %v579
        %v589 = vadd.f32 %v467, %v574
        %v590 = vadd.f32 %v468, %v576
        %v591 = vadd.f32 %v469, %v580
        %v592 = vadd.f32 %v470, %v578
        %v593 = vld [vmem:[#allocation2 + $0x8] sm:$0xff]
        %v594 = vld [vmem:[#allocation2 + $0x10] sm:$0xff]
        %v595 = vld [vmem:[#allocation2 + $0x18] sm:$0xff]
        %v596 = vld [vmem:[#allocation2 + $0x28] sm:$0xff]
        %v597 = vld [vmem:[#allocation2 + $0x30] sm:$0xff]
        %v598 = vld [vmem:[#allocation2 + $0x38] sm:$0xff]
        %s599 = scalar_lea.vmem %s291, 80 [#allocation3]
        %v600 = vld [vmem:[%s599] sm:$0xff]
        %v601 = vld [vmem:[%s599 + $0x8] sm:$0xff]
        %603 = vset.pattern.permute.xlu0 0
        %604 = vperm.xlu0 %603, %v600
        %v605 = vpop.permute.xlu0 %604
        %608 = vset.pattern.permute.xlu0 0
        %609 = vperm.xlu0 %608, %v601
        %v610 = vpop.permute.xlu0 %609
        %v612 = vmul.f32 %v593, %v605
        %v613 = vmul.f32 %v594, %v605
        %v614 = vmul.f32 %v595, %v605
        %v615 = vmul.f32 %v596, %v610
        %v616 = vmul.f32 %v597, %v610
        %v617 = vmul.f32 %v598, %v610
        %624 = vrot.lane.b32.xlu0 %v612, 112
        %v625 = vpop.permute.xlu0 %624
        %626 = vrot.lane.b32.xlu0 %v613, 112
        %v627 = vpop.permute.xlu0 %626
        %628 = vrot.lane.b32.xlu0 %v614, 112
        %v629 = vpop.permute.xlu0 %628
        %630 = vrot.lane.b32.xlu0 %v615, 112
        %v631 = vpop.permute.xlu0 %630
        %632 = vrot.lane.b32.xlu0 %v616, 112
        %v633 = vpop.permute.xlu0 %632
        %634 = vrot.lane.b32.xlu0 %v617, 112
        %v635 = vpop.permute.xlu0 %634
        %v636 = vsel %vm533, %v625, %v627
        %v637 = vsel %vm533, %v627, %v629
        %v638 = vsel %vm533, %v631, %v633
        %v639 = vsel %vm533, %v633, %v635
        %v646 = vadd.f32 %v490, %v625
        %v647 = vadd.f32 %v491, %v636
        %v648 = vadd.f32 %v492, %v637
        %v649 = vadd.f32 %v493, %v631
        %v650 = vadd.f32 %v494, %v638
        %v651 = vadd.f32 %v495, %v639
        %s652 = scalar_lea.vmem %s291, 96 [#allocation3]
        %v653 = vld [vmem:[%s652] sm:$0xff]
        %v654 = vld [vmem:[%s652 + $0x8] sm:$0xff]
        %656 = vset.pattern.permute.xlu0 0
        %657 = vperm.xlu0 %656, %v653
        %v658 = vpop.permute.xlu0 %657
        %661 = vset.pattern.permute.xlu0 0
        %662 = vperm.xlu0 %661, %v654
        %v663 = vpop.permute.xlu0 %662
        %v665 = vmul.f32 %v593, %v658
        %v666 = vmul.f32 %v594, %v658
        %v667 = vmul.f32 %v595, %v658
        %v668 = vmul.f32 %v596, %v663
        %v669 = vmul.f32 %v597, %v663
        %v670 = vmul.f32 %v598, %v663
        %677 = vrot.lane.b32.xlu0 %v665, 96
        %v678 = vpop.permute.xlu0 %677
        %679 = vrot.lane.b32.xlu0 %v666, 96
        %v680 = vpop.permute.xlu0 %679
        %681 = vrot.lane.b32.xlu0 %v667, 96
        %v682 = vpop.permute.xlu0 %681
        %683 = vrot.lane.b32.xlu0 %v668, 96
        %v684 = vpop.permute.xlu0 %683
        %685 = vrot.lane.b32.xlu0 %v669, 96
        %v686 = vpop.permute.xlu0 %685
        %687 = vrot.lane.b32.xlu0 %v670, 96
        %v688 = vpop.permute.xlu0 %687
        %vm689 = vcmask 785408
        %v690 = vsel %vm689, %v678, %v680
        %v691 = vsel %vm689, %v680, %v682
        %v692 = vsel %vm689, %v684, %v686
        %v693 = vsel %vm689, %v686, %v688
        %v700 = vadd.f32 %v544, %v678
        %v701 = vadd.f32 %v545, %v690
        %v702 = vadd.f32 %v546, %v691
        %v703 = vadd.f32 %v547, %v684
        %v704 = vadd.f32 %v548, %v692
        %v705 = vadd.f32 %v549, %v693
        %s706 = scalar_lea.vmem %s291, 112 [#allocation3]
        %v707 = vld [vmem:[%s706] sm:$0xff]
        %v708 = vld [vmem:[%s706 + $0x8] sm:$0xff]
        %710 = vset.pattern.permute.xlu0 0
        %711 = vperm.xlu0 %710, %v707
        %v712 = vpop.permute.xlu0 %711
        %715 = vset.pattern.permute.xlu0 0
        %716 = vperm.xlu0 %715, %v708
        %v717 = vpop.permute.xlu0 %716
        %v719 = vmul.f32 %v593, %v712
        %v720 = vmul.f32 %v594, %v712
        %v721 = vmul.f32 %v595, %v712
        %v722 = vmul.f32 %v596, %v717
        %v723 = vmul.f32 %v597, %v717
        %v724 = vmul.f32 %v598, %v717
        %731 = vrot.lane.b32.xlu0 %v719, 96
        %v732 = vpop.permute.xlu0 %731
        %733 = vrot.lane.b32.xlu0 %v720, 96
        %v734 = vpop.permute.xlu0 %733
        %735 = vrot.lane.b32.xlu0 %v721, 96
        %v736 = vpop.permute.xlu0 %735
        %737 = vrot.lane.b32.xlu0 %v722, 96
        %v738 = vpop.permute.xlu0 %737
        %739 = vrot.lane.b32.xlu0 %v723, 96
        %v740 = vpop.permute.xlu0 %739
        %741 = vrot.lane.b32.xlu0 %v724, 96
        %v742 = vpop.permute.xlu0 %741
        %v743 = vsel %vm689, %v732, %v734
        %v744 = vsel %vm689, %v734, %v736
        %v745 = vsel %vm689, %v738, %v740
        %v746 = vsel %vm689, %v740, %v742
        %v753 = vadd.f32 %v587, %v732
        %v754 = vadd.f32 %v588, %v743
        %v755 = vadd.f32 %v589, %v744
        %v756 = vadd.f32 %v590, %v738
        %v757 = vadd.f32 %v591, %v745
        %v758 = vadd.f32 %v592, %v746
        %s759 = scalar_lea.vmem %s291, 128 [#allocation3]
        %v760 = vld [vmem:[%s759] sm:$0xff]
        %v761 = vld [vmem:[%s759 + $0x8] sm:$0xff]
        %763 = vset.pattern.permute.xlu0 0
        %764 = vperm.xlu0 %763, %v760
        %v765 = vpop.permute.xlu0 %764
        %768 = vset.pattern.permute.xlu0 0
        %769 = vperm.xlu0 %768, %v761
        %v770 = vpop.permute.xlu0 %769
        %v772 = vmul.f32 %v593, %v765
        %v773 = vmul.f32 %v594, %v765
        %v774 = vmul.f32 %v595, %v765
        %v775 = vmul.f32 %v596, %v770
        %v776 = vmul.f32 %v597, %v770
        %v777 = vmul.f32 %v598, %v770
        %784 = vrot.lane.b32.xlu0 %v772, 96
        %v785 = vpop.permute.xlu0 %784
        %786 = vrot.lane.b32.xlu0 %v773, 96
        %v787 = vpop.permute.xlu0 %786
        %788 = vrot.lane.b32.xlu0 %v774, 96
        %v789 = vpop.permute.xlu0 %788
        %790 = vrot.lane.b32.xlu0 %v775, 96
        %v791 = vpop.permute.xlu0 %790
        %792 = vrot.lane.b32.xlu0 %v776, 96
        %v793 = vpop.permute.xlu0 %792
        %794 = vrot.lane.b32.xlu0 %v777, 96
        %v795 = vpop.permute.xlu0 %794
        %v796 = vsel %vm689, %v785, %v787
        %v797 = vsel %vm689, %v787, %v789
        %v798 = vsel %vm689, %v791, %v793
        %v799 = vsel %vm689, %v793, %v795
        %v806 = vadd.f32 %v646, %v785
        %v807 = vadd.f32 %v647, %v796
        %v808 = vadd.f32 %v648, %v797
        %v809 = vadd.f32 %v649, %v791
        %v810 = vadd.f32 %v650, %v798
        %v811 = vadd.f32 %v651, %v799
        %818 = vrot.lane.b32.xlu0 %v700, 17
        %v819 = vpop.permute.xlu0 %818
        %820 = vrot.lane.b32.xlu0 %v701, 17
        %v821 = vpop.permute.xlu0 %820
        %822 = vrot.lane.b32.xlu0 %v702, 17
        %v823 = vpop.permute.xlu0 %822
        %824 = vrot.lane.b32.xlu0 %v703, 17
        %v825 = vpop.permute.xlu0 %824
        %826 = vrot.lane.b32.xlu0 %v704, 17
        %v827 = vpop.permute.xlu0 %826
        %828 = vrot.lane.b32.xlu0 %v705, 17
        %v829 = vpop.permute.xlu0 %828
        %vm830 = vcmask 138240
        %v831 = vsel %vm830, %v819, %v821
        %v832 = vsel %vm830, %v821, %v823
        %v833 = vsel %vm830, %v825, %v827
        %v834 = vsel %vm830, %v827, %v829
        %v839 = vsel %vm408, %v831, 0.0
        %v840 = vsel %vm409, %v832, 0.0
        %v841 = vsel %vm408, %v833, 0.0
        %v842 = vsel %vm409, %v834, 0.0
        %847 = vrot.lane.b32.xlu0 %v839, 112
        %v848 = vpop.permute.xlu0 %847
        %849 = vrot.lane.b32.xlu0 %v840, 112
        %v850 = vpop.permute.xlu0 %849
        %851 = vrot.lane.b32.xlu0 %v841, 112
        %v852 = vpop.permute.xlu0 %851
        %853 = vrot.lane.b32.xlu0 %v842, 112
        %v854 = vpop.permute.xlu0 %853
        %v855 = vsel %vm533, %v848, %v850
        %v856 = vsel %vm533, %v852, %v854
        %v863 = vadd.f32 %v753, %v848
        %v864 = vadd.f32 %v754, %v855
        %v865 = vadd.f32 %v755, %v850
        %v866 = vadd.f32 %v756, %v852
        %v867 = vadd.f32 %v757, %v856
        %v868 = vadd.f32 %v758, %v854
        %875 = vrot.lane.b32.xlu0 %v806, 15
        %v876 = vpop.permute.xlu0 %875
        %877 = vrot.lane.b32.xlu0 %v807, 15
        %v878 = vpop.permute.xlu0 %877
        %879 = vrot.lane.b32.xlu0 %v808, 15
        %v880 = vpop.permute.xlu0 %879
        %881 = vrot.lane.b32.xlu0 %v809, 15
        %v882 = vpop.permute.xlu0 %881
        %883 = vrot.lane.b32.xlu0 %v810, 15
        %v884 = vpop.permute.xlu0 %883
        %885 = vrot.lane.b32.xlu0 %v811, 15
        %v886 = vpop.permute.xlu0 %885
        %vm887 = vcmask 121856
        %v888 = vsel %vm887, %v876, %v878
        %v889 = vsel %vm887, %v878, %v880
        %v890 = vsel %vm887, %v882, %v884
        %v891 = vsel %vm887, %v884, %v886
        %v896 = vsel %vm414, %v888, 0.0
        %v897 = vsel %vm415, %v889, 0.0
        %v898 = vsel %vm414, %v890, 0.0
        %v899 = vsel %vm415, %v891, 0.0
        %904 = vrot.lane.b32.xlu0 %v896, 112
        %v905 = vpop.permute.xlu0 %904
        %906 = vrot.lane.b32.xlu0 %v897, 112
        %v907 = vpop.permute.xlu0 %906
        %908 = vrot.lane.b32.xlu0 %v898, 112
        %v909 = vpop.permute.xlu0 %908
        %910 = vrot.lane.b32.xlu0 %v899, 112
        %v911 = vpop.permute.xlu0 %910
        %v912 = vsel %vm533, %v905, %v907
        %v913 = vsel %vm533, %v909, %v911
        %v920 = vadd.f32 %v863, %v905
        %v921 = vadd.f32 %v864, %v912
        %v922 = vadd.f32 %v865, %v907
        %v923 = vadd.f32 %v866, %v909
        %v924 = vadd.f32 %v867, %v913
        %v925 = vadd.f32 %v868, %v911
        %v926 = vld [vmem:[%s348] sm:$0xff]
        %v927 = vld [vmem:[%s348 + $0x8] sm:$0xff]
        %929 = vset.pattern.permute.xlu0 0
        %930 = vperm.xlu0 %929, %v926
        %v931 = vpop.permute.xlu0 %930
        %934 = vset.pattern.permute.xlu0 0
        %935 = vperm.xlu0 %934, %v927
        %v936 = vpop.permute.xlu0 %935
        %v938 = vadd.f32 %v920, %v931
        %v939 = vadd.f32 %v921, %v931
        %v940 = vadd.f32 %v922, %v931
        %v941 = vadd.f32 %v923, %v936
        %v942 = vadd.f32 %v924, %v936
        %v943 = vadd.f32 %v925, %v936
        %v944 = vmax.f32 %v938, 0.0
        %v945 = vmax.f32 %v939, 0.0
        %v946 = vmax.f32 %v940, 0.0
        %v947 = vmax.f32 %v941, 0.0
        %v948 = vmax.f32 %v942, 0.0
        %v949 = vmax.f32 %v943, 0.0
        %956 = vrot.lane.b32.xlu0 %v944, 16
        %v957 = vpop.permute.xlu0 %956
        %958 = vrot.lane.b32.xlu0 %v945, 16
        %v959 = vpop.permute.xlu0 %958
        %960 = vrot.lane.b32.xlu0 %v946, 16
        %v961 = vpop.permute.xlu0 %960
        %962 = vrot.lane.b32.xlu0 %v947, 16
        %v963 = vpop.permute.xlu0 %962
        %964 = vrot.lane.b32.xlu0 %v948, 16
        %v965 = vpop.permute.xlu0 %964
        %966 = vrot.lane.b32.xlu0 %v949, 16
        %v967 = vpop.permute.xlu0 %966
        %vm968 = vcmask 130048
        %v969 = vsel %vm968, %v957, %v959
        %v970 = vsel %vm968, %v959, %v961
        %v971 = vsel %vm968, %v963, %v965
        %v972 = vsel %vm968, %v965, %v967
        %977 = vst [vmem:[%s359] sm:$0xff] %v969
        %978 = vst [vmem:[%s359 + $0x8] sm:$0xff] %v970
        %979 = vst [vmem:[%s359 + $0x10] sm:$0xff] %v971
        %980 = vst [vmem:[%s359 + $0x18] sm:$0xff] %v972
        %s981 = smul.u32 2, %s19
        %p982 = scmp.lt.s32.totalorder %s18, 1
        %s983 = scalar_select %p982, %s18, 1
        %p984 = scmp.lt.s32.totalorder %s981, 3
        %s985 = scalar_select %p984, %s981, 3
        %s986 = smul.addr %s985, 2
        %s987 = smul.addr %s983, 8
        %s988 = sadd.s32 %s986, %s987
        %s989 = smul.addr %s988, 8
        %s990 = scalar_lea.vmem %s3, %s989
        // Predicated region
        $region71: #{gconv_bn_relu_pallas.1} parent=65 // pred_check
          %p991 = pneg %p126
        $region72: #{gconv_bn_relu_pallas.1} parent=65 // pred_check_branch
          %993 = sbr.rel (%p991) target = $region74
        $region73: #{gconv_bn_relu_pallas.1} parent=65 // pred_region
          %s994 = smul.u32 2, %s19
        $region74: #{gconv_bn_relu_pallas.1} parent=65 // pred_fallthru
          _
      $region66: #{gconv_bn_relu_pallas.1} parent=5 // pred_fallthru
        _
      %p995 = scmp.le.s32.totalorder 2, %s9
      // Predicated region
      $region75: #{gconv_bn_relu_pallas.1} parent=5 // pred_check
        %p996 = pneg %p995
      $region76: #{gconv_bn_relu_pallas.1} parent=5 // pred_check_branch
        %998 = sbr.rel (%p996) target = $region78
      $region77: #{gconv_bn_relu_pallas.1} parent=5 // pred_region
        %s999 = ssub.s32 %s9, 2
        // Predicated region
        $region79: #{gconv_bn_relu_pallas.1} parent=77 // pred_check
          %p1000 = pneg %p132
        $region80: #{gconv_bn_relu_pallas.1} parent=77 // pred_check_branch
          %1002 = sbr.rel (%p1000) target = $region82
        $region81: #{gconv_bn_relu_pallas.1} parent=77 // pred_region
          %s1003 = smul.u32 2, %s21
          %p1004 = scmp.lt.s32.totalorder %s20, 1
          %s1005 = scalar_select %p1004, %s20, 1
          %p1006 = scmp.lt.s32.totalorder %s1003, 3
          %s1007 = scalar_select %p1006, %s1003, 3
          %s1008 = smul.addr %s1007, 2
          %s1009 = smul.addr %s1005, 8
          %s1010 = sadd.s32 %s1008, %s1009
          %s1011 = smul.addr %s1010, 8
          %s1012 = scalar_lea.vmem %s3, %s1011
        $region82: #{gconv_bn_relu_pallas.1} parent=77 // pred_fallthru
          _
      $region78: #{gconv_bn_relu_pallas.1} parent=5 // pred_fallthru
        _
    $region6: #{gconv_bn_relu_pallas.1} parent=1 // loop_footer
      %s13 = sadd.s32 1, %s9
    $region7: #{gconv_bn_relu_pallas.1} parent=1 // loop_footer_branch
      %8 = sbr.rel target = $region3
    $region8: #{gconv_bn_relu_pallas.1} parent=1 // loop_exit
      _

</llo_original>
